<compile_context>
chip_gen: v7x
topology: tpu7x:2x2x1
jax: 0.10.0
libtpu: 0.0.40
codegen_flags: <defaults>
</compile_context>

<pallas_src>
import jax
import jax.numpy as jnp
from jax.experimental import pallas as pl
from jax.experimental.pallas import tpu as pltpu


def _conv1d_im2col_matmul_kernel(x_col_ref, w_ref, o_ref):
    # x_col_ref : (C_in*K, N*L_out_pad)  im2col'd input, lane-dense last dim
    # w_ref     : (C_out,  C_in*K)       tap-flattened weight (no in-kernel slicing)
    # o_ref     : (C_out,  N*L_out_pad)  lane-dense output (last dim % 128 == 0)
    o_ref[...] = jnp.dot(
        w_ref[...], x_col_ref[...],
        preferred_element_type=jnp.float32,   # f32 accumulate on the MXU
    ).astype(o_ref.dtype)


def basic_conv1d(x, weight, *, compute_dtype=None):
    """Conv1d forward: bias=False, stride=1, padding=0, dilation=1, groups=1."""
    n, c_in, l = x.shape
    c_out, c_in_w, k = weight.shape
    assert c_in == c_in_w, "channel mismatch"
    l_out = l - k + 1
    assert l_out >= 1, "kernel larger than input length"

    # ---- wrapper-side layout plumbing (one-time XLA work, per perf review) ----
    # Pad so the per-batch output length is a multiple of 128 (lane-dense stores).
    l_out_pad = ((l_out + 127) // 128) * 128
    l_pad = l_out_pad + k - 1
    x_pad = jnp.pad(x, ((0, 0), (0, 0), (0, l_pad - l)))               # (N, C_in, L_pad)

    # im2col: K shifted copies; rows ordered (c_in-major, tap-minor) to match
    # weight.reshape(C_out, C_in*K) below.
    x_col = jnp.stack(
        [x_pad[:, :, kk:kk + l_out_pad] for kk in range(k)], axis=2)   # (N, C_in, K, Lp)
    x_col = x_col.reshape(n, c_in * k, l_out_pad)                      # (N, C_in*K, Lp)
    # Fold batch onto the lane axis -> one (C_out, C_in*K) @ (C_in*K, N*Lp) matmul.
    x_col = x_col.transpose(1, 0, 2).reshape(c_in * k, n * l_out_pad)  # (C_in*K, N*Lp)

    w_flat = weight.reshape(c_out, c_in * k)                           # (C_out, C_in*K)

    if compute_dtype is not None:  # e.g. jnp.bfloat16 on v6e/v7x (f32 accumulate kept)
        x_col = x_col.astype(compute_dtype)
        w_flat = w_flat.astype(compute_dtype)

    # Single invocation, everything resident in VMEM (no grid, no pipeline steps).
    out_col = pl.pallas_call(
        _conv1d_im2col_matmul_kernel,
        out_shape=jax.ShapeDtypeStruct((c_out, n * l_out_pad), x.dtype),
        in_specs=[pl.BlockSpec(memory_space=pltpu.MemorySpace.VMEM),
                  pl.BlockSpec(memory_space=pltpu.MemorySpace.VMEM)],
        out_specs=pl.BlockSpec(memory_space=pltpu.MemorySpace.VMEM),
    )(x_col, w_flat)

    # (C_out, N*Lp) -> (N, C_out, L_out): undo the fold, drop the lane padding.
    out = out_col.reshape(c_out, n, l_out_pad).transpose(1, 0, 2)[:, :, :l_out]
    return out


if __name__ == "__main__":
    # Module config (synthetic, deterministic): Conv1d(in=4, out=8, kernel=3, bias=False)
    in_channels, out_channels, kernel_size = 4, 8, 3
    batch, length = 2, 16

    key = jax.random.PRNGKey(0)
    kx, kw = jax.random.split(key)
    x = jax.random.normal(kx, (batch, in_channels, length), dtype=jnp.float32)
    # Deterministic weight init (kaiming-uniform-like scale).
    fan_in = in_channels * kernel_size
    bound = 1.0 / (fan_in ** 0.5)
    weight = jax.random.uniform(
        kw, (out_channels, in_channels, kernel_size),
        dtype=jnp.float32, minval=-bound, maxval=bound)

    out = basic_conv1d(x, weight)
    out = jax.block_until_ready(out)

    # Reference check against jax.lax conv (same semantics as nn.Conv1d, bias=False).
    ref = jax.lax.conv_general_dilated(
        x, weight, window_strides=(1,), padding="VALID",
        dimension_numbers=("NCH", "OIH", "NCH"))
    assert out.shape == (batch, out_channels, length - kernel_size + 1)
    assert jnp.allclose(out, ref, atol=1e-5, rtol=1e-5)

    print("KERNEL_OK")
</pallas_src>

<mosaic_0001>
module attributes {stable_mosaic.version = 11 : i64} {
  func.func @_conv1d_im2col_matmul_kernel(%arg0: memref<12x256xf32, #tpu.memory_space<vmem>>, %arg1: memref<8x12xf32, #tpu.memory_space<vmem>>, %arg2: memref<8x256xf32, #tpu.memory_space<vmem>>) attributes {dimension_semantics = [], scalar_prefetch = 0 : i64, scratch_operands = 0 : i64, tpu.core_type = #tpu.core_type<tc>} {
    %c0 = arith.constant 0 : index
    %c0_0 = arith.constant 0 : index
    %0 = vector.load %arg1[%c0, %c0_0] : memref<8x12xf32, #tpu.memory_space<vmem>>, vector<8x12xf32>
    %c0_1 = arith.constant 0 : index
    %c0_2 = arith.constant 0 : index
    %1 = vector.load %arg0[%c0_1, %c0_2] : memref<12x256xf32, #tpu.memory_space<vmem>>, vector<12x256xf32>
    %cst = arith.constant dense<0.000000e+00> : vector<8x256xf32>
    %2 = tpu.matmul %0, %1, %cst {dimension_numbers = #tpu.dot_dimension_numbers<[1], [0], [0], [1], [0, 0, 1, 1], [], []>} : vector<8x12xf32>, vector<12x256xf32>, vector<8x256xf32> -> vector<8x256xf32>
    %c0_3 = arith.constant 0 : index
    %c0_4 = arith.constant 0 : index
    %3 = vector.load %arg2[%c0_3, %c0_4] : memref<8x256xf32, #tpu.memory_space<vmem>>, vector<8x256xf32>
    tpu.vector_store %arg2[%c0_3, %c0_4], %2 {strides = array<i32>} : memref<8x256xf32, #tpu.memory_space<vmem>>, vector<8x256xf32>,
    return
  }
}

</mosaic_0001>

<llo_original>
// kernel: tpu_custom_call.1
$region0: #{tpu_custom_call.1}
  #allocation0 [shape = 'u32[]', space=smem, size = 0x4, offset = 0x4, fixed_abs, tag = 'smem constant byte address 0x4 - core index']
  #allocation1 [shape = 'u32[144,128]{1,0:T(1,128)}', space=vmem, size = 0x12000, scoped, tag = 'internal scratch']
  %s0 = inlined_call_operand.hbm [shape: f32[12,256], index: 0, kind: input, shape index: {}]
  %s1 = inlined_call_operand.hbm [shape: f32[8,12], index: 1, kind: input, shape index: {}]
  %s2 = inlined_call_operand.hbm [shape: f32[8,256], index: 2, kind: output, shape index: {}]
  %s3 = sld [smem:[#allocation0]]
  $region26: #{tpu_custom_call.1} parent=0
    _
  %s5 = ssub.s32 1, %s3
  %s6 = scalar_select 0, %s5, %s3
  $region1: #{tpu_custom_call.1} parent=0
    #allocation2 [shape = 'u8[16384]{0}', space=vmem, size = 0x4000, scoped, tag = 'input window, operand 0, single buffered']
    #allocation3 [shape = 's32[1]{0}', space=sflag, size = 0x4, scoped, tag = 'scoped memory for tpu_custom_call.1']
    #allocation4 [shape = 's32[1]{0}', space=sflag, size = 0x4, scoped, tag = 'scoped memory for tpu_custom_call.1']
    #allocation5 [shape = 'u8[4096]{0}', space=vmem, size = 0x1000, scoped, tag = 'input window, operand 1, single buffered']
    #allocation6 [shape = 's32[1]{0}', space=sflag, size = 0x4, scoped, tag = 'scoped memory for tpu_custom_call.1']
    #allocation7 [shape = 'u8[8192]{0}', space=vmem, size = 0x2000, scoped, tag = 'output window, operand 0, single buffered']
    %7 = vsyncpa [#allocation3], 0
    %8 = vsyncpa [#allocation6], 0
    %9 = vsyncpa [#allocation4], 0
    // Predicated region
    $region2: #{tpu_custom_call.1} parent=1 // pred_check
      _
    $region3: #{tpu_custom_call.1} parent=1 // pred_check_branch
      %11 = sbr.rel (0) target = $region5
    $region4: #{tpu_custom_call.1} parent=1 // pred_region
      %s13 = ssub.s32 512, 512
      %14 = vsyncadd [#allocation3], %s13
      %s15 = sshll.u32 [#allocation2], 4
      %s16 = int_to_ptr.vmem [resolvable:$true] %s15
      %21 = dma.hbm_to_vmem [thread:$0]  %s0, 512, %s16, [#allocation3], 256, 256, 16
    $region5: #{tpu_custom_call.1} parent=1 // pred_fallthru
      _
    // Predicated region
    $region6: #{tpu_custom_call.1} parent=1 // pred_check
      _
    $region7: #{tpu_custom_call.1} parent=1 // pred_check_branch
      %23 = sbr.rel (0) target = $region9
    $region8: #{tpu_custom_call.1} parent=1 // pred_region
      %s25 = ssub.s32 128, 128
      %26 = vsyncadd [#allocation6], %s25
      %s28 = sshll.u32 [#allocation5], 4
      %s29 = int_to_ptr.vmem [resolvable:$true] %s28
      %31 = dma.hbm_to_vmem [thread:$0]  %s1, 128, %s29, [#allocation6]
    $region9: #{tpu_custom_call.1} parent=1 // pred_fallthru
      _
    // Predicated region
    $region10: #{tpu_custom_call.1} parent=1 // pred_check
      _
    $region11: #{tpu_custom_call.1} parent=1 // pred_check_branch
      %33 = sbr.rel (0) target = $region13
    $region12: #{tpu_custom_call.1} parent=1 // pred_region
      %34 = dma.done [#allocation3], 512
    $region13: #{tpu_custom_call.1} parent=1 // pred_fallthru
      _
    // Predicated region
    $region14: #{tpu_custom_call.1} parent=1 // pred_check
      _
    $region15: #{tpu_custom_call.1} parent=1 // pred_check_branch
      %36 = sbr.rel (0) target = $region17
    $region16: #{tpu_custom_call.1} parent=1 // pred_region
      %37 = dma.done [#allocation6], 128
    $region17: #{tpu_custom_call.1} parent=1 // pred_fallthru
      _
    %v38 = vld [vmem:[#allocation5] sm:$0xff]
    %v39 = vld [vmem:[#allocation2] sm:$0xff]
    %v40 = vld [vmem:[#allocation2 + $0x8] sm:$0xff]
    %v41 = vld [vmem:[#allocation2 + $0x10] sm:$0xf]
    %v42 = vld [vmem:[#allocation2 + $0x18] sm:$0xf]
    %vm43 = vcmask 97280
    %v45 = vsel %vm43, %v38, 0
    %vm47 = vcmask 1043456
    %v49 = vsel %vm47, %v41, 0
    %v52 = vsel %vm47, %v42, 0
    %54 = vmatprep.subr.mxu0 %v40
    %55 = vmatpush1.msra.mxu0 %v39
    %56 = vmatprep.subr.mxu0 %v52
    %57 = vmatpush1.msra.mxu0 %v49
    %58 = vmatprep.subr.mxu0 0.0
    %59 = vmatpush1.msra.mxu0 0.0
    %60 = vmatprep.subr.mxu0 0.0
    %61 = vmatpush1.msra.mxu0 0.0
    %62 = vmatprep.subr.mxu0 0.0
    %63 = vmatpush1.msra.mxu0 0.0
    %64 = vmatprep.subr.mxu0 0.0
    %65 = vmatpush1.msra.mxu0 0.0
    %66 = vmatprep.subr.mxu0 0.0
    %67 = vmatpush1.msra.mxu0 0.0
    %68 = vmatprep.subr.mxu0 0.0
    %69 = vmatpush1.msra.mxu0 0.0
    %70 = vmatprep.subr.mxu0 0.0
    %71 = vmatpush1.msra.mxu0 0.0
    %72 = vmatprep.subr.mxu0 0.0
    %73 = vmatpush1.msra.mxu0 0.0
    %74 = vmatprep.subr.mxu0 0.0
    %75 = vmatpush1.msra.mxu0 0.0
    %76 = vmatprep.subr.mxu0 0.0
    %77 = vmatpush1.msra.mxu0 0.0
    %78 = vmatprep.subr.mxu0 0.0
    %79 = vmatpush1.msra.mxu0 0.0
    %80 = vmatprep.subr.mxu0 0.0
    %81 = vmatpush1.msra.mxu0 0.0
    %82 = vmatprep.subr.mxu0 0.0
    %83 = vmatpush1.msra.mxu0 0.0
    %84 = vmatprep.subr.mxu0 0.0
    %85 = vmatpush1.msra.mxu0 0.0
    %86 = vmatprep.subr.mxu0 0.0
    %87 = vmatpush1.msra.mxu0 0.0
    %88 = vmatprep.subr.mxu0 0.0
    %89 = vmatpush1.msra.mxu0 0.0
    %90 = vmatprep.subr.mxu0 0.0
    %91 = vmatpush1.msra.mxu0 0.0
    %92 = vmatprep.subr.mxu0 0.0
    %93 = vmatpush1.msra.mxu0 0.0
    %94 = vmatprep.subr.mxu0 0.0
    %95 = vmatpush1.msra.mxu0 0.0
    %96 = vmatprep.subr.mxu0 0.0
    %97 = vmatpush1.msra.mxu0 0.0
    %98 = vmatprep.subr.mxu0 0.0
    %99 = vmatpush1.msra.mxu0 0.0
    %100 = vmatprep.subr.mxu0 0.0
    %101 = vmatpush1.msra.mxu0 0.0
    %102 = vmatprep.subr.mxu0 0.0
    %103 = vmatpush1.msra.mxu0 0.0
    %104 = vmatprep.subr.mxu0 0.0
    %105 = vmatpush1.msra.mxu0 0.0
    %106 = vmatprep.subr.mxu0 0.0
    %107 = vmatpush1.msra.mxu0 0.0
    %108 = vmatprep.subr.mxu0 0.0
    %109 = vmatpush1.msra.mxu0 0.0
    %110 = vmatprep.subr.mxu0 0.0
    %111 = vmatpush1.msra.mxu0 0.0
    %112 = vmatprep.subr.mxu0 0.0
    %113 = vmatpush1.msra.mxu0 0.0
    %114 = vmatprep.subr.mxu0 0.0
    %115 = vmatpush1.msra.mxu0 0.0
    %116 = vmatprep.subr.mxu0 0.0
    %117 = vmatpush1.msra.mxu0 0.0
    %118 = vmatprep.mubr.f32.mxu0 0.0
    %119 = vmatmul.mubr.f32.gmra.mrb[0].mxu0 %v45
    %v120 = vpop.f32.mrb[0].mxu0
    %v121 = vadd.f32 0.0, %v120
    %v122 = vpop.f32.mrb[0].mxu0
    %v123 = vadd.f32 0.0, %v122
    %124 = vdwg.mxu0
    %125 = vst [vmem:[#allocation7] sm:$0xff] %v121
    %126 = vst [vmem:[#allocation7 + $0x8] sm:$0xff] %v123
    // Predicated region
    $region18: #{tpu_custom_call.1} parent=1 // pred_check
      _
    $region19: #{tpu_custom_call.1} parent=1 // pred_check_branch
      %128 = sbr.rel (0) target = $region21
    $region20: #{tpu_custom_call.1} parent=1 // pred_region
      %s130 = ssub.s32 256, 256
      %131 = vsyncadd [#allocation4], %s130
      %s133 = sshll.u32 [#allocation7], 4
      %s134 = int_to_ptr.vmem [resolvable:$true] %s133
      %136 = dma.vmem_to_hbm [thread:$0]  %s134, 256, %s2, [#allocation4]
    $region21: #{tpu_custom_call.1} parent=1 // pred_fallthru
      _
    // Predicated region
    $region22: #{tpu_custom_call.1} parent=1 // pred_check
      _
    $region23: #{tpu_custom_call.1} parent=1 // pred_check_branch
      %138 = sbr.rel (0) target = $region25
    $region24: #{tpu_custom_call.1} parent=1 // pred_region
      %139 = dma.done [#allocation4], 256
    $region25: #{tpu_custom_call.1} parent=1 // pred_fallthru
      _
    %140 = vsyncpa [#allocation3], 1
    %141 = vsyncpa [#allocation6], 1
    %142 = vsyncpa [#allocation4], 1

</llo_original>
